<compile_context>
chip_gen: v7x
topology: tpu7x:2x2x1
jax: 0.10.0
libtpu: 0.0.40
codegen_flags: <defaults>
</compile_context>

<pallas_src>
import math

import jax
import jax.numpy as jnp
from jax.experimental import pallas as pl
from jax.experimental.pallas import tpu as pltpu

_LANE = 128
_TILE_BYTES = 2 * 1024 * 1024  # per-buffer tile budget (x4 buffers ~ 8 MiB VMEM)


def _capture_copy_kernel(x_ref, o_ref):
    # Pure "detach": materialize a copy of the activation tile.
    o_ref[...] = x_ref[...]


def _capture(x):
    """Materialize a detached copy of activation `x` via a Pallas copy kernel."""
    x = jax.lax.stop_gradient(x)  # detach semantics
    orig_shape = x.shape
    dtype = x.dtype
    itemsize = jnp.dtype(dtype).itemsize
    total = math.prod(orig_shape) if orig_shape else 1
    if total == 0:
        return x

    # Sublane packing: 8 for 32-bit, 16 for bf16, 32 for int8/fp8.
    sublane = max(8, 32 // itemsize)
    chunk = sublane * _LANE

    # Flatten to a lane-dense [rows, 128] slab (pad tail if not chunk-aligned).
    flat = x.reshape(-1)
    padded_total = ((total + chunk - 1) // chunk) * chunk
    if padded_total != total:
        flat = jnp.pad(flat, (0, padded_total - total))
    rows = padded_total // _LANE
    x2d = flat.reshape(rows, _LANE)

    # Byte-budgeted row tile, aligned to the sublane packing.
    row_bytes = _LANE * itemsize
    budget_rows = max(sublane, (_TILE_BYTES // row_bytes) // sublane * sublane)
    tile_rows = min(budget_rows, rows)
    if tile_rows == rows and rows >= 2 * sublane:
        # Split into >=2 grid steps so both v7x TensorCores stream the copy.
        tile_rows = ((rows // 2) + sublane - 1) // sublane * sublane
    grid = (pl.cdiv(rows, tile_rows),)

    bytes_accessed = 2 * rows * _LANE * itemsize

    out2d = pl.pallas_call(
        _capture_copy_kernel,
        out_shape=jax.ShapeDtypeStruct((rows, _LANE), dtype),
        grid_spec=pltpu.PrefetchScalarGridSpec(
            num_scalar_prefetch=0,
            grid=grid,
            in_specs=[pl.BlockSpec((tile_rows, _LANE), lambda i: (i, 0))],
            out_specs=pl.BlockSpec((tile_rows, _LANE), lambda i: (i, 0)),
        ),
        compiler_params=pltpu.CompilerParams(
            dimension_semantics=("parallel",),
            vmem_limit_bytes=32 * 1024 * 1024,
        ),
        cost_estimate=pl.CostEstimate(
            flops=0, transcendentals=0, bytes_accessed=bytes_accessed),
    )(x2d)

    out_flat = out2d.reshape(-1)
    if padded_total != total:
        out_flat = out_flat[:total]
    return out_flat.reshape(orig_shape)


class ActivationCapturer:
    """JAX/Pallas port of the PyTorch forward-hook ActivationCapturer."""

    def __init__(self, layer, capture_input=False):
        self.layer = layer              # kept only for parity with the PyTorch module
        self.capture_input = capture_input
        self.captured = None

    def forward(self, module, input, output):
        if self.capture_input:
            self.captured = _capture(input[0])
        else:
            self.captured = _capture(output)

    __call__ = forward


if __name__ == "__main__":
    key = jax.random.PRNGKey(0)
    k_in, k_out, k_big = jax.random.split(key, 3)

    # Small shapes consistent with a transformer-backbone hook: [B, T, H].
    B, T, H = 2, 8, 32
    hook_input = (jax.random.normal(k_in, (B, T, H), dtype=jnp.float32),)
    hook_output = jax.random.normal(k_out, (B, T, H), dtype=jnp.float32)

    # capture_input=False path: captures `output`  (non-128-multiple total -> pad path)
    cap_out = ActivationCapturer(layer=None, capture_input=False)
    cap_out(None, hook_input, hook_output)
    jax.block_until_ready(cap_out.captured)
    assert cap_out.captured.shape == (B, T, H)
    assert jnp.allclose(cap_out.captured, hook_output)

    # capture_input=True path: captures `input[0]`
    cap_in = ActivationCapturer(layer=None, capture_input=True)
    cap_in(None, hook_input, hook_output)
    jax.block_until_ready(cap_in.captured)
    assert cap_in.captured.shape == (B, T, H)
    assert jnp.allclose(cap_in.captured, hook_input[0])

    # Larger lane-aligned hidden (no-pad path, multi-step grid) + bf16 dtype.
    big = jax.random.normal(k_big, (2, 8, 1024), dtype=jnp.float32)
    cap_big = ActivationCapturer(layer=None, capture_input=False)
    cap_big(None, (big,), big)
    jax.block_until_ready(cap_big.captured)
    assert jnp.array_equal(cap_big.captured, big)

    big_bf16 = big.astype(jnp.bfloat16)
    cap_bf16 = ActivationCapturer(layer=None, capture_input=False)
    cap_bf16(None, (big_bf16,), big_bf16)
    jax.block_until_ready(cap_bf16.captured)
    assert jnp.array_equal(cap_bf16.captured, big_bf16)

    print("KERNEL_OK")
</pallas_src>

<mosaic_0001>
module attributes {stable_mosaic.version = 11 : i64} {
  func.func @_capture_copy_kernel(%arg0: i32, %arg1: memref<8x128xf32, #tpu.memory_space<vmem>>, %arg2: memref<8x128xf32, #tpu.memory_space<vmem>>) attributes {dimension_semantics = [#tpu.dimension_semantics<parallel>], iteration_bounds = array<i64: 1>, scalar_prefetch = 0 : i64, scratch_operands = 0 : i64, tpu.core_type = #tpu.core_type<tc>, window_params = [{transform_indices = @transform_0, window_bounds = array<i64: 8, 128>}, {transform_indices = @transform_1, window_bounds = array<i64: 8, 128>}]} {
    %c0 = arith.constant 0 : index
    %c0_0 = arith.constant 0 : index
    %0 = vector.load %arg1[%c0, %c0_0] : memref<8x128xf32, #tpu.memory_space<vmem>>, vector<8x128xf32>
    %c0_1 = arith.constant 0 : index
    %c0_2 = arith.constant 0 : index
    %1 = vector.load %arg2[%c0_1, %c0_2] : memref<8x128xf32, #tpu.memory_space<vmem>>, vector<8x128xf32>
    tpu.vector_store %arg2[%c0_1, %c0_2], %0 {strides = array<i32>} : memref<8x128xf32, #tpu.memory_space<vmem>>, vector<8x128xf32>,
    return
  }
  func.func @transform_0(%arg0: i32) -> (i32, i32) {
    %c0_i32 = arith.constant 0 : i32
    %c0_i32_0 = arith.constant 0 : i32
    return %arg0, %c0_i32 : i32, i32
  }
  func.func @transform_1(%arg0: i32) -> (i32, i32) {
    %c0_i32 = arith.constant 0 : i32
    %c0_i32_0 = arith.constant 0 : i32
    return %arg0, %c0_i32 : i32, i32
  }
}

</mosaic_0001>

<llo_original>
// kernel: tpu_custom_call.1
$region0: #{tpu_custom_call.1}
  #allocation0 [shape = 'u32[]', space=smem, size = 0x4, offset = 0x4, fixed_abs, tag = 'smem constant byte address 0x4 - core index']
  #allocation1 [shape = 'u32[144,128]{1,0:T(1,128)}', space=vmem, size = 0x12000, scoped, tag = 'internal scratch']
  %s0 = inlined_call_operand.hbm [shape: f32[8,128], index: 0, kind: input, shape index: {}]
  %s1 = inlined_call_operand.hbm [shape: f32[8,128], index: 1, kind: output, shape index: {}]
  %s2 = sld [smem:[#allocation0]]
  $region18: #{tpu_custom_call.1} parent=0
    _
  %s4 = ssub.s32 1, %s2
  %s5 = scalar_select 0, %s4, %s2
  $region1: #{tpu_custom_call.1} parent=0
    #allocation2 [shape = 'u8[4096]{0}', space=vmem, size = 0x1000, scoped, tag = 'input window, operand 0, single buffered']
    #allocation3 [shape = 's32[1]{0}', space=sflag, size = 0x4, scoped, tag = 'scoped memory for tpu_custom_call.1']
    #allocation4 [shape = 's32[1]{0}', space=sflag, size = 0x4, scoped, tag = 'scoped memory for tpu_custom_call.1']
    #allocation5 [shape = 'u8[4096]{0}', space=vmem, size = 0x1000, scoped, tag = 'output window, operand 0, single buffered']
    %6 = vsyncpa [#allocation3], 0
    %7 = vsyncpa [#allocation4], 0
    // Predicated region
    $region2: #{tpu_custom_call.1} parent=1 // pred_check
      _
    $region3: #{tpu_custom_call.1} parent=1 // pred_check_branch
      %9 = sbr.rel (0) target = $region5
    $region4: #{tpu_custom_call.1} parent=1 // pred_region
      %s11 = ssub.s32 128, 128
      %12 = vsyncadd [#allocation3], %s11
      %s14 = sshll.u32 [#allocation2], 4
      %s15 = int_to_ptr.vmem [resolvable:$true] %s14
      %17 = dma.hbm_to_vmem [thread:$0]  %s0, 128, %s15, [#allocation3]
    $region5: #{tpu_custom_call.1} parent=1 // pred_fallthru
      _
    // Predicated region
    $region6: #{tpu_custom_call.1} parent=1 // pred_check
      _
    $region7: #{tpu_custom_call.1} parent=1 // pred_check_branch
      %19 = sbr.rel (0) target = $region9
    $region8: #{tpu_custom_call.1} parent=1 // pred_region
      %20 = dma.done [#allocation3], 128
    $region9: #{tpu_custom_call.1} parent=1 // pred_fallthru
      _
    %v21 = vld [vmem:[#allocation2] sm:$0xff]
    %22 = vst [vmem:[#allocation5] sm:$0xff] %v21
    // Predicated region
    $region10: #{tpu_custom_call.1} parent=1 // pred_check
      _
    $region11: #{tpu_custom_call.1} parent=1 // pred_check_branch
      %24 = sbr.rel (0) target = $region13
    $region12: #{tpu_custom_call.1} parent=1 // pred_region
      %s26 = ssub.s32 128, 128
      %27 = vsyncadd [#allocation4], %s26
      %s29 = sshll.u32 [#allocation5], 4
      %s30 = int_to_ptr.vmem [resolvable:$true] %s29
      %32 = dma.vmem_to_hbm [thread:$0]  %s30, 128, %s1, [#allocation4]
    $region13: #{tpu_custom_call.1} parent=1 // pred_fallthru
      _
    // Predicated region
    $region14: #{tpu_custom_call.1} parent=1 // pred_check
      _
    $region15: #{tpu_custom_call.1} parent=1 // pred_check_branch
      %34 = sbr.rel (0) target = $region17
    $region16: #{tpu_custom_call.1} parent=1 // pred_region
      %35 = dma.done [#allocation4], 128
    $region17: #{tpu_custom_call.1} parent=1 // pred_fallthru
      _
    %36 = vsyncpa [#allocation3], 1
    %37 = vsyncpa [#allocation4], 1

</llo_original>
